<compile_context>
chip_gen: v5e
topology: v5e:2x2
jax: 0.10.0
libtpu: 0.0.40
codegen_flags: <defaults>
</compile_context>

<pallas_src>
import functools

import jax
import jax.numpy as jnp
from jax.experimental import pallas as pl
from jax.experimental.pallas import tpu as pltpu

F32 = jnp.float32

# ~2 MiB blocks: past the ~85%-of-HBM-roofline knee, and double-buffered
# in + out (~8 MiB) still fits v5e's 16 MiB default scoped VMEM.
_TARGET_BLOCK_BYTES = 2 * 1024 * 1024


def _largest_divisor_under(n, limit):
    limit = max(1, min(n, limit))
    for d in range(limit, 0, -1):
        if n % d == 0:
            return d
    return 1


# ----------------------------------------------------------------------------
# Kernels
# ----------------------------------------------------------------------------
def _lerp_kernel(x_ref, avg_ref, o_ref, *, threshold):
    # Block covers only truncated layers: out = lerp(avg, x, t) = avg + t*(x-avg).
    x = x_ref[...]                                    # (bb, rows, D)
    avg = avg_ref[...]                                # (1, 1 or rows, D)
    o_ref[...] = (avg + threshold * (x - avg)).astype(o_ref.dtype)


def _masked_kernel(x_ref, avg_ref, o_ref, *, threshold, max_layer):
    # General path (full layer coverage). Per-row weight column instead of a
    # full-tile int32 mask:
    #   out = x + w*(avg - x),  w = (1 - t) on truncated layers, 0 elsewhere
    #       == avg + t*(x - avg) where truncated, x elsewhere.
    x = x_ref[...]                                    # (bb, L, D)
    avg = avg_ref[...]                                # (1, 1 or L, D)
    layer_idx = jax.lax.broadcasted_iota(
        jnp.int32, (x.shape[0], x.shape[1], 1), 1)
    w = jnp.where(layer_idx < max_layer,
                  jnp.asarray(1.0 - threshold, x.dtype),
                  jnp.asarray(0.0, x.dtype))
    o_ref[...] = x + w * (avg - x)


# ----------------------------------------------------------------------------
# Wrapper
# ----------------------------------------------------------------------------
def truncation(x, avg_latent, *, max_layer=8, threshold=0.7):
    """x: (B, L, D);  avg_latent: (D,), (1, D), or (L, D) buffer."""
    assert x.ndim == 3, "Truncation.forward expects a 3-D latent (B, L, D)"
    B, L, D = x.shape

    avg = jnp.asarray(avg_latent, x.dtype)
    if avg.ndim == 1:
        assert avg.shape[0] == D
        avg = avg.reshape(1, 1, D)
    elif avg.ndim == 2:
        assert avg.shape[-1] == D and avg.shape[0] in (1, L)
        avg = avg.reshape(1, avg.shape[0], D)
    else:
        assert avg.shape[-1] == D and avg.shape[-2] in (1, L)
        avg = avg.reshape(1, avg.shape[-2], D)
    avg_L = avg.shape[1]

    eff_max = int(min(int(max_layer), L))
    if eff_max <= 0:
        return x  # nothing truncated

    threshold = float(threshold)
    itemsize = jnp.dtype(x.dtype).itemsize

    # Fast path: truncated slab is sublane-aligned (or covers all layers), so
    # only touch layers [0, eff_max) and alias the output onto x; layers
    # >= eff_max keep their input values via the aliased buffer.
    fast = (eff_max == L) or (eff_max % 8 == 0)

    if fast:
        rows = eff_max
        kernel = functools.partial(_lerp_kernel, threshold=threshold)
    else:
        rows = L
        kernel = functools.partial(
            _masked_kernel, threshold=threshold, max_layer=eff_max)

    # Batch chunk size: biggest divisor of B keeping the block near 2 MiB.
    bb = _largest_divisor_under(
        B, max(1, _TARGET_BLOCK_BYTES // (rows * D * itemsize)))
    grid = (B // bb,)
    avg_rows = 1 if avg_L == 1 else rows

    return pl.pallas_call(
        kernel,
        out_shape=jax.ShapeDtypeStruct((B, L, D), x.dtype),
        grid=grid,
        in_specs=[
            pl.BlockSpec((bb, rows, D), lambda i: (i, 0, 0)),     # latent slab
            pl.BlockSpec((1, avg_rows, D), lambda i: (0, 0, 0)),  # VMEM-resident avg
        ],
        out_specs=pl.BlockSpec((bb, rows, D), lambda i: (i, 0, 0)),
        input_output_aliases={0: 0} if fast else {},
        compiler_params=pltpu.CompilerParams(
            dimension_semantics=("parallel",),
        ),
    )(x, avg)


# ----------------------------------------------------------------------------
# Self-test
# ----------------------------------------------------------------------------
if __name__ == "__main__":
    key = jax.random.PRNGKey(0)
    k_avg, k_x = jax.random.split(key)

    # Shapes consistent with the module: (batch, num_style_layers, latent_dim)
    B, L, D = 2, 18, 512
    max_layer, threshold = 8, 0.7

    avg_latent = jax.random.normal(k_avg, (D,), dtype=F32)   # register_buffer('avg_latent')
    x = jax.random.normal(k_x, (B, L, D), dtype=F32)

    # Pure-JAX reference (mirrors the PyTorch forward exactly).  Computed
    # BEFORE the kernel call because x is donated into the kernel.
    interp_ref = avg_latent[None, None, :] + threshold * (x - avg_latent[None, None, :])
    do_trunc = (jnp.arange(L) < max_layer)[None, :, None]
    ref = jax.block_until_ready(jnp.where(do_trunc, interp_ref, x))

    run = jax.jit(
        functools.partial(truncation, max_layer=max_layer, threshold=threshold),
        donate_argnums=(0,),   # let the in-place alias actually reuse x's buffer
    )
    out = jax.block_until_ready(run(x, avg_latent))

    assert out.shape == (B, L, D), out.shape
    assert bool(jnp.all(jnp.isfinite(out)))
    assert bool(jnp.allclose(out, ref, atol=1e-6, rtol=1e-6))
    print("KERNEL_OK")
</pallas_src>

<mosaic_0001>
module attributes {stable_mosaic.version = 11 : i64} {
  func.func @_lerp_kernel(%arg0: i32, %arg1: memref<2x8x512xf32, #tpu.memory_space<vmem>>, %arg2: memref<1x1x512xf32, #tpu.memory_space<vmem>>, %arg3: memref<2x8x512xf32, #tpu.memory_space<vmem>>) attributes {dimension_semantics = [#tpu.dimension_semantics<parallel>], iteration_bounds = array<i64: 1>, scalar_prefetch = 0 : i64, scratch_operands = 0 : i64, tpu.core_type = #tpu.core_type<tc>, window_params = [{transform_indices = @transform_0, window_bounds = array<i64: 2, 8, 512>}, {pipeline_mode = #tpu.pipeline_mode<synchronous>, transform_indices = @transform_1, window_bounds = array<i64: 1, 1, 512>}, {transform_indices = @transform_2, window_bounds = array<i64: 2, 8, 512>}]} {
    %c0 = arith.constant 0 : index
    %c0_0 = arith.constant 0 : index
    %c0_1 = arith.constant 0 : index
    %0 = vector.load %arg1[%c0, %c0_0, %c0_1] : memref<2x8x512xf32, #tpu.memory_space<vmem>>, vector<2x8x512xf32>
    %c0_2 = arith.constant 0 : index
    %c0_3 = arith.constant 0 : index
    %c0_4 = arith.constant 0 : index
    %1 = vector.load %arg2[%c0_2, %c0_3, %c0_4] : memref<1x1x512xf32, #tpu.memory_space<vmem>>, vector<1x1x512xf32>
    %2 = vector.broadcast %1 : vector<1x1x512xf32> to vector<2x8x512xf32>
    %3 = arith.subf %0, %2 : vector<2x8x512xf32>
    %cst = arith.constant 0.699999988 : f32
    %4 = vector.broadcast %cst : f32 to vector<2x8x512xf32>
    %5 = arith.mulf %4, %3 : vector<2x8x512xf32>
    %6 = vector.broadcast %1 : vector<1x1x512xf32> to vector<2x8x512xf32>
    %7 = arith.addf %6, %5 : vector<2x8x512xf32>
    %c0_5 = arith.constant 0 : index
    %c0_6 = arith.constant 0 : index
    %c0_7 = arith.constant 0 : index
    %8 = vector.load %arg3[%c0_5, %c0_6, %c0_7] : memref<2x8x512xf32, #tpu.memory_space<vmem>>, vector<2x8x512xf32>
    tpu.vector_store %arg3[%c0_5, %c0_6, %c0_7], %7 {strides = array<i32>} : memref<2x8x512xf32, #tpu.memory_space<vmem>>, vector<2x8x512xf32>,
    return
  }
  func.func @transform_0(%arg0: i32) -> (i32, i32, i32) {
    %c0_i32 = arith.constant 0 : i32
    %c0_i32_0 = arith.constant 0 : i32
    %c0_i32_1 = arith.constant 0 : i32
    return %arg0, %c0_i32, %c0_i32_0 : i32, i32, i32
  }
  func.func @transform_1(%arg0: i32) -> (i32, i32, i32) {
    %c0_i32 = arith.constant 0 : i32
    %c0_i32_0 = arith.constant 0 : i32
    %c0_i32_1 = arith.constant 0 : i32
    %c0_i32_2 = arith.constant 0 : i32
    return %c0_i32, %c0_i32_0, %c0_i32_1 : i32, i32, i32
  }
  func.func @transform_2(%arg0: i32) -> (i32, i32, i32) {
    %c0_i32 = arith.constant 0 : i32
    %c0_i32_0 = arith.constant 0 : i32
    %c0_i32_1 = arith.constant 0 : i32
    return %arg0, %c0_i32, %c0_i32_0 : i32, i32, i32
  }
}

</mosaic_0001>

<llo_original>
// kernel: truncation.1
$region0: #{truncation.1}
  #allocation0 [shape = 'u32[]', space=smem, size = 0x4, offset = 0x4, fixed_abs, tag = 'smem constant byte address 0x4 - core index']
  #allocation1 [shape = 'u32[72,128]{1,0:T(1,128)}', space=vmem, size = 0x9000, scoped, tag = 'internal scratch']
  %s0 = inlined_call_operand.vmem [shape: f32[2,18,512], index: 0, kind: input, shape index: {}, may-alias: {0,2}]
  %s1 = inlined_call_operand.vmem [shape: f32[1,1,512], index: 1, kind: input, shape index: {}]
  %s2 = inlined_call_operand.vmem [shape: f32[2,18,512], index: 2, kind: output, shape index: {}, may-alias: {0,2}]
  %s3 = sld [smem:[#allocation0]]
  $region60: #{truncation.1} parent=0
    _
  %s5 = ssub.s32 1, %s3
  %s6 = scalar_select 0, %s5, %s3
  $region1: #{truncation.1} parent=0
    #allocation2 [shape = 'u8[32768]{0}', space=vmem, size = 0x8000, scoped, tag = 'input window, operand 0, single buffered']
    #allocation3 [shape = 'u8[32768]{0}', space=vmem, size = 0x8000, scoped, tag = 'output window, operand 0, single buffered']
    // Predicated region
    $region2: #{truncation.1} parent=1 // pred_check
      _
    $region3: #{truncation.1} parent=1 // pred_check_branch
      %8 = sbr.rel (0) target = $region5
    $region4: #{truncation.1} parent=1 // pred_region
      // Predicated region
      $region6: #{truncation.1} parent=4 // pred_check
        _
      $region7: #{truncation.1} parent=4 // pred_check_branch
        %10 = sbr.rel (0) target = $region9
      $region8: #{truncation.1} parent=4 // pred_region
        // Predicated region
        $region10: #{truncation.1} parent=8 // pred_check
          _
        $region11: #{truncation.1} parent=8 // pred_check_branch
          %12 = sbr.rel (0) target = $region13
        $region12: #{truncation.1} parent=8 // pred_region
          loop: start=0, step=1, limit=1
          $region14: #{truncation.1} parent=12 // loop_pre_header
            _
          $region15: #{truncation.1} parent=12 // loop_header
            %s14 = sphi 0, %s18
            %p15 = scmp.ge.s32.totalorder %s14, 1
            %s19 = sphi %s0, %s0
            %s20 = sphi [#allocation2], [#allocation2]
          $region16: #{truncation.1} parent=12 // loop_header_branch
            %17 = sbr.rel (%p15) target = $region20
          $region17: #{truncation.1} parent=12 // loop_body
            %v21 = vld [vmem:[%s19] sm:$0xff]
            %22 = vst [vmem:[%s20] sm:$0xff] %v21
            %v23 = vld [vmem:[%s19 + $0x8] sm:$0xff]
            %24 = vst [vmem:[%s20 + $0x8] sm:$0xff] %v23
            %v25 = vld [vmem:[%s19 + $0x10] sm:$0xff]
            %26 = vst [vmem:[%s20 + $0x10] sm:$0xff] %v25
            %v27 = vld [vmem:[%s19 + $0x18] sm:$0xff]
            %28 = vst [vmem:[%s20 + $0x18] sm:$0xff] %v27
            %v29 = vld [vmem:[%s19 + $0x60] sm:$0xff]
            %30 = vst [vmem:[%s20 + $0x20] sm:$0xff] %v29
            %v31 = vld [vmem:[%s19 + $0x68] sm:$0xff]
            %32 = vst [vmem:[%s20 + $0x28] sm:$0xff] %v31
            %v33 = vld [vmem:[%s19 + $0x70] sm:$0xff]
            %34 = vst [vmem:[%s20 + $0x30] sm:$0xff] %v33
            %v35 = vld [vmem:[%s19 + $0x78] sm:$0xff]
            %36 = vst [vmem:[%s20 + $0x38] sm:$0xff] %v35
          $region18: #{truncation.1} parent=12 // loop_footer
            %s18 = sadd.s32 1, %s14
          $region19: #{truncation.1} parent=12 // loop_footer_branch
            %13 = sbr.rel target = $region15
          $region20: #{truncation.1} parent=12 // loop_exit
            _
        $region13: #{truncation.1} parent=8 // pred_fallthru
          _
        // Predicated region
        $region21: #{truncation.1} parent=8 // pred_check
          _
        $region22: #{truncation.1} parent=8 // pred_check_branch
          %38 = sbr.rel target = $region24
        $region23: #{truncation.1} parent=8 // pred_region
          _
        $region24: #{truncation.1} parent=8 // pred_fallthru
          _
      $region9: #{truncation.1} parent=4 // pred_fallthru
        _
      %39 = vnop
    $region5: #{truncation.1} parent=1 // pred_fallthru
      _
    // Predicated region
    $region25: #{truncation.1} parent=1 // pred_check
      _
    $region26: #{truncation.1} parent=1 // pred_check_branch
      %41 = sbr.rel (0) target = $region28
    $region27: #{truncation.1} parent=1 // pred_region
      _
    $region28: #{truncation.1} parent=1 // pred_fallthru
      _
    // Predicated region
    $region29: #{truncation.1} parent=1 // pred_check
      _
    $region30: #{truncation.1} parent=1 // pred_check_branch
      %43 = sbr.rel (0) target = $region32
    $region31: #{truncation.1} parent=1 // pred_region
      _
    $region32: #{truncation.1} parent=1 // pred_fallthru
      _
    %v44 = vld [vmem:[#allocation2] sm:$0xff]
    %v45 = vld [vmem:[#allocation2 + $0x8] sm:$0xff]
    %v46 = vld [vmem:[#allocation2 + $0x10] sm:$0xff]
    %v47 = vld [vmem:[#allocation2 + $0x18] sm:$0xff]
    %v48 = vld [vmem:[#allocation2 + $0x20] sm:$0xff]
    %v49 = vld [vmem:[#allocation2 + $0x28] sm:$0xff]
    %v50 = vld [vmem:[#allocation2 + $0x30] sm:$0xff]
    %v51 = vld [vmem:[#allocation2 + $0x38] sm:$0xff]
    %v52 = vld [vmem:[%s1] sm:$0xf]
    %v54 = vperm.slane %v52, 0
    %v55 = vperm.slane %v52, 1
    %v56 = vperm.slane %v52, 2
    %v57 = vperm.slane %v52, 3
    %v62 = vsub.f32 %v44, %v54
    %v63 = vsub.f32 %v45, %v55
    %v64 = vsub.f32 %v46, %v56
    %v65 = vsub.f32 %v47, %v57
    %v66 = vsub.f32 %v48, %v54
    %v67 = vsub.f32 %v49, %v55
    %v68 = vsub.f32 %v50, %v56
    %v69 = vsub.f32 %v51, %v57
    %v70 = vmul.f32 %v62, 0.7
    %v71 = vmul.f32 %v63, 0.7
    %v72 = vmul.f32 %v64, 0.7
    %v73 = vmul.f32 %v65, 0.7
    %v74 = vmul.f32 %v66, 0.7
    %v75 = vmul.f32 %v67, 0.7
    %v76 = vmul.f32 %v68, 0.7
    %v77 = vmul.f32 %v69, 0.7
    %v78 = vadd.f32 %v54, %v70
    %v79 = vadd.f32 %v55, %v71
    %v80 = vadd.f32 %v56, %v72
    %v81 = vadd.f32 %v57, %v73
    %v82 = vadd.f32 %v54, %v74
    %v83 = vadd.f32 %v55, %v75
    %v84 = vadd.f32 %v56, %v76
    %v85 = vadd.f32 %v57, %v77
    %86 = vst [vmem:[#allocation3] sm:$0xff] %v78
    %87 = vst [vmem:[#allocation3 + $0x8] sm:$0xff] %v79
    %88 = vst [vmem:[#allocation3 + $0x10] sm:$0xff] %v80
    %89 = vst [vmem:[#allocation3 + $0x18] sm:$0xff] %v81
    %90 = vst [vmem:[#allocation3 + $0x20] sm:$0xff] %v82
    %91 = vst [vmem:[#allocation3 + $0x28] sm:$0xff] %v83
    %92 = vst [vmem:[#allocation3 + $0x30] sm:$0xff] %v84
    %93 = vst [vmem:[#allocation3 + $0x38] sm:$0xff] %v85
    // Predicated region
    $region33: #{truncation.1} parent=1 // pred_check
      _
    $region34: #{truncation.1} parent=1 // pred_check_branch
      %95 = sbr.rel (0) target = $region36
    $region35: #{truncation.1} parent=1 // pred_region
      // Predicated region
      $region37: #{truncation.1} parent=35 // pred_check
        _
      $region38: #{truncation.1} parent=35 // pred_check_branch
        %97 = sbr.rel (0) target = $region40
      $region39: #{truncation.1} parent=35 // pred_region
        // Predicated region
        $region41: #{truncation.1} parent=39 // pred_check
          _
        $region42: #{truncation.1} parent=39 // pred_check_branch
          %99 = sbr.rel (0) target = $region44
        $region43: #{truncation.1} parent=39 // pred_region
          loop: start=0, step=1, limit=1
          $region45: #{truncation.1} parent=43 // loop_pre_header
            _
          $region46: #{truncation.1} parent=43 // loop_header
            %s101 = sphi 0, %s105
            %p102 = scmp.ge.s32.totalorder %s101, 1
            %s106 = sphi [#allocation3], [#allocation3]
            %s107 = sphi %s2, %s2
          $region47: #{truncation.1} parent=43 // loop_header_branch
            %104 = sbr.rel (%p102) target = $region51
          $region48: #{truncation.1} parent=43 // loop_body
            %v108 = vld [vmem:[%s106] sm:$0xff]
            %109 = vst [vmem:[%s107] sm:$0xff] %v108
            %v110 = vld [vmem:[%s106 + $0x8] sm:$0xff]
            %111 = vst [vmem:[%s107 + $0x8] sm:$0xff] %v110
            %v112 = vld [vmem:[%s106 + $0x10] sm:$0xff]
            %113 = vst [vmem:[%s107 + $0x10] sm:$0xff] %v112
            %v114 = vld [vmem:[%s106 + $0x18] sm:$0xff]
            %115 = vst [vmem:[%s107 + $0x18] sm:$0xff] %v114
            %v116 = vld [vmem:[%s106 + $0x20] sm:$0xff]
            %117 = vst [vmem:[%s107 + $0x60] sm:$0xff] %v116
            %v118 = vld [vmem:[%s106 + $0x28] sm:$0xff]
            %119 = vst [vmem:[%s107 + $0x68] sm:$0xff] %v118
            %v120 = vld [vmem:[%s106 + $0x30] sm:$0xff]
            %121 = vst [vmem:[%s107 + $0x70] sm:$0xff] %v120
            %v122 = vld [vmem:[%s106 + $0x38] sm:$0xff]
            %123 = vst [vmem:[%s107 + $0x78] sm:$0xff] %v122
          $region49: #{truncation.1} parent=43 // loop_footer
            %s105 = sadd.s32 1, %s101
          $region50: #{truncation.1} parent=43 // loop_footer_branch
            %100 = sbr.rel target = $region46
          $region51: #{truncation.1} parent=43 // loop_exit
            _
        $region44: #{truncation.1} parent=39 // pred_fallthru
          _
        // Predicated region
        $region52: #{truncation.1} parent=39 // pred_check
          _
        $region53: #{truncation.1} parent=39 // pred_check_branch
          %125 = sbr.rel target = $region55
        $region54: #{truncation.1} parent=39 // pred_region
          _
        $region55: #{truncation.1} parent=39 // pred_fallthru
          _
      $region40: #{truncation.1} parent=35 // pred_fallthru
        _
      %126 = vnop
    $region36: #{truncation.1} parent=1 // pred_fallthru
      _
    // Predicated region
    $region56: #{truncation.1} parent=1 // pred_check
      _
    $region57: #{truncation.1} parent=1 // pred_check_branch
      %128 = sbr.rel (0) target = $region59
    $region58: #{truncation.1} parent=1 // pred_region
      _
    $region59: #{truncation.1} parent=1 // pred_fallthru
      _

</llo_original>
